<compile_context>
chip_gen: v5e
topology: v5e:2x2
jax: 0.10.0
libtpu: 0.0.40
codegen_flags: <defaults>
</compile_context>

<pallas_src>
import numpy as np
import jax
import jax.numpy as jnp
from jax.experimental import pallas as pl
from jax.experimental.pallas import tpu as pltpu


def gaussian_1d(ksize: int, sigma: float) -> np.ndarray:
    """Matches getGaussiankernel: integer-centered taps, normalized to sum 1."""
    x = np.arange(-(ksize - 1) // 2, (ksize - 1) // 2 + 1, dtype=np.float32)
    k = np.exp(-0.5 * np.square(x / np.float32(sigma)))
    return (k / k.sum()).astype(np.float32)


def _make_hmat(TW: int, g: np.ndarray) -> np.ndarray:
    """(TW*sf, TW) block-diagonal horizontal weights: column j gets g in rows
    j*sf:(j+1)*sf.  Identical for every width tile."""
    sf = g.shape[0]
    m = np.zeros((TW * sf, TW), np.float32)
    for j in range(TW):
        m[j * sf:(j + 1) * sf, j] = g
    return m


def _pick_row_tile(Ho: int, sf: int, TWc: int, budget_bytes: int = 4 << 20) -> int:
    """Output-row tile: multiple of 8 (or == Ho) sized to ~budget input block."""
    if Ho <= 8:
        return Ho
    tr_max = (budget_bytes // (sf * TWc * 4)) // 8 * 8
    tr_max = max(8, min(512, tr_max))
    if tr_max >= Ho:
        return Ho
    # prefer an exact divisor of Ho (no ragged edge block) if one is close
    for tr in range(tr_max, max(8, tr_max // 2) - 1, -8):
        if Ho % tr == 0:
            return tr
    return tr_max


def _make_kernel(g: np.ndarray, sf: int):
    taps = tuple(float(v) for v in g)

    def kernel(x_ref, hmat_ref, o_ref):
        # x_ref:    (TR*sf, TW*sf)   natural-layout rows of one channel
        # hmat_ref: (TW*sf, TW)      horizontal block-diagonal Gaussian weights
        # o_ref:    (TR, TW)         downsampled tile (lane-dense last dim)
        TR = o_ref.shape[0]
        if sf == 1:
            t = x_ref[...]
        else:
            # vertical sf-tap reduction on the VPU via sublane-strided loads
            t = taps[0] * x_ref[pl.ds(0, TR, stride=sf), :]
            for k in range(1, sf):
                t = t + taps[k] * x_ref[pl.ds(k, TR, stride=sf), :]
        o_ref[...] = jnp.dot(
            t, hmat_ref[...], preferred_element_type=jnp.float32
        ).astype(o_ref.dtype)

    return kernel


def spatial_degradation(x: jnp.ndarray, sf: int) -> jnp.ndarray:
    """x: (1, C, H, W) float32 -> (1, C, H//sf, W//sf) Gaussian stride-sf conv."""
    B, C, H, W = x.shape
    assert B == 1, "Spatial_Degradation's transpose trick requires batch == 1"
    # TODO(synk): only the Gaussian (stride == ksize, non-overlapping) path is
    # implemented; the predefined-kernel path with stride != ksize is not.
    Ho = (H - sf) // sf + 1
    Wo = (W - sf) // sf + 1
    Hc, Wc = Ho * sf, Wo * sf

    g = gaussian_1d(sf, sf * 0.866)

    # Width tile: full width when small, else a lane-dense multiple of 128.
    TW = Wo if Wo <= 256 else 256
    TWc = TW * sf
    TR = _pick_row_tile(Ho, sf, TWc)
    TRsf = TR * sf

    hmat = jnp.asarray(_make_hmat(TW, g))                      # (TW*sf, TW)

    # TODO(synk): if H or W is not divisible by sf this crop materializes a
    # copy; for the common divisible case it is an identity view.
    xc = x[0, :, :Hc, :Wc]                                     # (C, Hc, Wc)

    # Honest VMEM accounting: double-buffered x / out / hmat blocks plus the
    # (TR, TW*sf) f32 matmul intermediate; cap well below v7x's 64 MiB.
    itemsize = jnp.dtype(x.dtype).itemsize
    x_blk = TRsf * TWc * itemsize
    o_blk = TR * TW * itemsize
    h_blk = TWc * TW * 4
    t_blk = TR * TWc * 4
    needed = 2 * x_blk + 2 * o_blk + 2 * h_blk + t_blk
    vmem_limit = int(min(48 << 20, max(16 << 20, 2 * needed)))

    grid = (C, pl.cdiv(Ho, TR), pl.cdiv(Wo, TW))

    out = pl.pallas_call(
        _make_kernel(g, sf),
        out_shape=jax.ShapeDtypeStruct((C, Ho, Wo), x.dtype),
        grid_spec=pltpu.PrefetchScalarGridSpec(
            num_scalar_prefetch=0,
            grid=grid,
            in_specs=[
                pl.BlockSpec((None, TRsf, TWc), lambda c, r, w: (c, r, w)),
                pl.BlockSpec((TWc, TW), lambda c, r, w: (0, 0)),
            ],
            out_specs=pl.BlockSpec((None, TR, TW), lambda c, r, w: (c, r, w)),
        ),
        compiler_params=pltpu.CompilerParams(
            dimension_semantics=("parallel", "parallel", "parallel"),
            vmem_limit_bytes=vmem_limit,
        ),
    )(xc, hmat)

    return out[None]                                           # (1, C, Ho, Wo)


if __name__ == "__main__":
    sf = 4
    B, C, H, W = 1, 4, 16, 16  # batch must be 1 (module constraint)

    key = jax.random.PRNGKey(0)
    x = jax.random.normal(key, (B, C, H, W), dtype=jnp.float32)

    out = spatial_degradation(x, sf)
    out = jax.block_until_ready(out)

    # pure-JAX reference (same semantics as the PyTorch conv with stride=sf)
    g = gaussian_1d(sf, sf * 0.866)
    w2d = jnp.asarray(np.outer(g, g))
    Ho, Wo = (H - sf) // sf + 1, (W - sf) // sf + 1
    xr = x[0, :, :Ho * sf, :Wo * sf].reshape(C, Ho, sf, Wo, sf)
    ref = jnp.einsum("ciujv,uv->cij", xr, w2d)[None]

    assert out.shape == (B, C, Ho, Wo), out.shape
    np.testing.assert_allclose(np.asarray(out), np.asarray(ref), rtol=1e-5, atol=1e-5)

    print("KERNEL_OK")
</pallas_src>

<mosaic_0001>
module attributes {stable_mosaic.version = 11 : i64} {
  func.func @kernel(%arg0: i32, %arg1: i32, %arg2: i32, %arg3: memref<1x16x16xf32, #tpu.memory_space<vmem>>, %arg4: memref<16x4xf32, #tpu.memory_space<vmem>>, %arg5: memref<1x4x4xf32, #tpu.memory_space<vmem>>) attributes {dimension_semantics = [#tpu.dimension_semantics<parallel>, #tpu.dimension_semantics<parallel>, #tpu.dimension_semantics<parallel>], iteration_bounds = array<i64: 4, 1, 1>, scalar_prefetch = 0 : i64, scratch_operands = 0 : i64, tpu.core_type = #tpu.core_type<tc>, window_params = [{transform_indices = @transform_0, window_bounds = array<i64: 1, 16, 16>}, {pipeline_mode = #tpu.pipeline_mode<synchronous>, transform_indices = @transform_1, window_bounds = array<i64: 16, 4>}, {transform_indices = @transform_2, window_bounds = array<i64: 1, 4, 4>}]} {
    %c0 = arith.constant 0 : index
    %c0_0 = arith.constant 0 : index
    %c0_1 = arith.constant 0 : index
    %0 = tpu.strided_load %arg3[%c0, %c0_0, %c0_1] {strides = array<i32: 1, 4, 1>} : memref<1x16x16xf32, #tpu.memory_space<vmem>>, vector<1x4x16xf32>
    %1 = vector.shape_cast %0 : vector<1x4x16xf32> to vector<4x16xf32>
    %cst = arith.constant 0.224836051 : f32
    %2 = vector.broadcast %cst : f32 to vector<4x16xf32>
    %3 = arith.mulf %2, %1 : vector<4x16xf32>
    %c0_2 = arith.constant 0 : index
    %c1 = arith.constant 1 : index
    %c0_3 = arith.constant 0 : index
    %4 = tpu.strided_load %arg3[%c0_2, %c1, %c0_3] {strides = array<i32: 1, 4, 1>} : memref<1x16x16xf32, #tpu.memory_space<vmem>>, vector<1x4x16xf32>
    %5 = vector.shape_cast %4 : vector<1x4x16xf32> to vector<4x16xf32>
    %cst_4 = arith.constant 0.254774481 : f32
    %6 = vector.broadcast %cst_4 : f32 to vector<4x16xf32>
    %7 = arith.mulf %6, %5 : vector<4x16xf32>
    %8 = arith.addf %3, %7 : vector<4x16xf32>
    %c0_5 = arith.constant 0 : index
    %c2 = arith.constant 2 : index
    %c0_6 = arith.constant 0 : index
    %9 = tpu.strided_load %arg3[%c0_5, %c2, %c0_6] {strides = array<i32: 1, 4, 1>} : memref<1x16x16xf32, #tpu.memory_space<vmem>>, vector<1x4x16xf32>
    %10 = vector.shape_cast %9 : vector<1x4x16xf32> to vector<4x16xf32>
    %cst_7 = arith.constant 0.265615016 : f32
    %11 = vector.broadcast %cst_7 : f32 to vector<4x16xf32>
    %12 = arith.mulf %11, %10 : vector<4x16xf32>
    %13 = arith.addf %8, %12 : vector<4x16xf32>
    %c0_8 = arith.constant 0 : index
    %c3 = arith.constant 3 : index
    %c0_9 = arith.constant 0 : index
    %14 = tpu.strided_load %arg3[%c0_8, %c3, %c0_9] {strides = array<i32: 1, 4, 1>} : memref<1x16x16xf32, #tpu.memory_space<vmem>>, vector<1x4x16xf32>
    %15 = vector.shape_cast %14 : vector<1x4x16xf32> to vector<4x16xf32>
    %cst_10 = arith.constant 0.254774481 : f32
    %16 = vector.broadcast %cst_10 : f32 to vector<4x16xf32>
    %17 = arith.mulf %16, %15 : vector<4x16xf32>
    %18 = arith.addf %13, %17 : vector<4x16xf32>
    %c0_11 = arith.constant 0 : index
    %c0_12 = arith.constant 0 : index
    %19 = vector.load %arg4[%c0_11, %c0_12] : memref<16x4xf32, #tpu.memory_space<vmem>>, vector<16x4xf32>
    %cst_13 = arith.constant dense<0.000000e+00> : vector<4x4xf32>
    %20 = tpu.matmul %18, %19, %cst_13 {dimension_numbers = #tpu.dot_dimension_numbers<[1], [0], [0], [1], [0, 0, 1, 1], [], []>} : vector<4x16xf32>, vector<16x4xf32>, vector<4x4xf32> -> vector<4x4xf32>
    %c0_14 = arith.constant 0 : index
    %c0_15 = arith.constant 0 : index
    %c0_16 = arith.constant 0 : index
    %21 = vector.load %arg5[%c0_14, %c0_15, %c0_16] : memref<1x4x4xf32, #tpu.memory_space<vmem>>, vector<1x4x4xf32>
    %22 = vector.shape_cast %21 : vector<1x4x4xf32> to vector<4x4xf32>
    %23 = vector.shape_cast %20 : vector<4x4xf32> to vector<1x4x4xf32>
    tpu.vector_store %arg5[%c0_14, %c0_15, %c0_16], %23 {strides = array<i32>} : memref<1x4x4xf32, #tpu.memory_space<vmem>>, vector<1x4x4xf32>,
    return
  }
  func.func @transform_0(%arg0: i32, %arg1: i32, %arg2: i32) -> (i32, i32, i32) {
    %c0_i32 = arith.constant 0 : i32
    return %arg0, %arg1, %arg2 : i32, i32, i32
  }
  func.func @transform_1(%arg0: i32, %arg1: i32, %arg2: i32) -> (i32, i32) {
    %c0_i32 = arith.constant 0 : i32
    %c0_i32_0 = arith.constant 0 : i32
    %c0_i32_1 = arith.constant 0 : i32
    return %c0_i32, %c0_i32_0 : i32, i32
  }
  func.func @transform_2(%arg0: i32, %arg1: i32, %arg2: i32) -> (i32, i32, i32) {
    %c0_i32 = arith.constant 0 : i32
    return %arg0, %arg1, %arg2 : i32, i32, i32
  }
}

</mosaic_0001>

<llo_original>
// kernel: tpu_custom_call.1
$region0: #{tpu_custom_call.1}
  #allocation0 [shape = 'u32[]', space=smem, size = 0x4, offset = 0x4, fixed_abs, tag = 'smem constant byte address 0x4 - core index']
  #allocation1 [shape = 'u32[72,128]{1,0:T(1,128)}', space=vmem, size = 0x9000, scoped, tag = 'internal scratch']
  %s0 = inlined_call_operand.hbm [shape: f32[4,16,16], index: 0, kind: input, shape index: {}]
  %s1 = inlined_call_operand.vmem [shape: f32[16,4], index: 1, kind: input, shape index: {}]
  %s2 = inlined_call_operand.hbm [shape: f32[4,4,4], index: 2, kind: output, shape index: {}]
  %s3 = sld [smem:[#allocation0]]
  $region45: #{tpu_custom_call.1} parent=0
    _
  %s5 = ssub.s32 1, %s3
  %s6 = scalar_select 0, %s5, %s3
  $region1: #{tpu_custom_call.1} parent=0
    #allocation2 [shape = 'u8[16384]{0}', space=vmem, size = 0x4000, scoped, tag = 'input window, operand 0']
    #allocation3 [shape = 's32[2]{0}', space=sflag, size = 0x8, scoped, tag = 'scoped memory for tpu_custom_call.1']
    #allocation4 [shape = 's32[2]{0}', space=sflag, size = 0x8, scoped, tag = 'scoped memory for tpu_custom_call.1']
    #allocation5 [shape = 'u8[4096]{0}', space=vmem, size = 0x1000, scoped, tag = 'output window, operand 0']
    %7 = vsyncpa [#allocation3], 0
    %s8 = scalar_lea.sflag [#allocation3], 1
    %9 = vsyncpa %s8, 0
    %10 = vsyncpa [#allocation4], 0
    %s11 = scalar_lea.sflag [#allocation4], 1
    %12 = vsyncpa %s11, 0
    loop: start=0, step=1, limit=6
    $region2: #{tpu_custom_call.1} parent=1 // loop_pre_header
      _
    $region3: #{tpu_custom_call.1} parent=1 // loop_header
      %s14 = sphi 0, %s18
      %p15 = scmp.ge.s32.totalorder %s14, 6
      %s21 = sphi 0, %s40
      %s22 = sphi 0, %s36
      %s23 = sphi 0, %s32
      %s24 = sphi 0, %s21
      %s25 = sphi 0, %s22
      %s26 = sphi 0, %s23
      %s27 = sphi 0, %s24
      %s28 = sphi 0, %s25
      %s29 = sphi 0, %s26
      %s47 = sphi 0, %s49
      %s50 = sphi 0, %s47
      %s51 = sphi 0, %s50
      %s67 = sphi 0, %s51
      %s71 = sphi 0, %s71
      %s73 = sphi 0, %s71
      %s74 = sphi 0, %s73
      %s88 = sphi 0, %s74
      %s98 = sphi 0, %s100
      %s101 = sphi 0, %s98
      %s102 = sphi 0, %s101
      %s118 = sphi 0, %s102
    $region4: #{tpu_custom_call.1} parent=1 // loop_header_branch
      %17 = sbr.rel (%p15) target = $region8
    $region5: #{tpu_custom_call.1} parent=1 // loop_body
      %s19 = ssub.s32 %s14, 1
      %s20 = ssub.s32 %s14, 2
      %s30 = sadd.s32 1, %s23
      %p31 = scmp.ge.s32.totalorder %s30, 1
      %s32 = scalar_select %p31, 0, %s30
      %s33 = sadd.s32 1, %s22
      %s34 = scalar_select %p31, %s33, %s22
      %p35 = scmp.ge.s32.totalorder %s34, 1
      %s36 = scalar_select %p35, 0, %s34
      %s37 = sadd.s32 1, %s21
      %s38 = scalar_select %p35, %s37, %s21
      %p39 = scmp.ge.s32.totalorder %s38, 4
      %s40 = scalar_select %p39, 0, %s38
      %s41 = ssub.s32 %s21, %s40
      %s42 = ssub.s32 %s22, %s36
      %s43 = sor.u32 %s41, %s42
      %s44 = ssub.s32 %s23, %s32
      %s45 = sor.u32 %s43, %s44
      %p46 = scmp.eq.s32.totalorder %s45, 0
      %s48 = sadd.s32 %s47, 1
      %s49 = scalar_select %p46, %s47, %s48
      %p52 = pneg %p46
      %p53 = scmp.eq.s32.totalorder %s14, 3
      %p54 = por %p52, %p53
      %p55 = scmp.ne.s32.totalorder %s47, %s50
      %p56 = scmp.eq.s32.totalorder %s14, 0
      %p57 = por %p55, %p56
      %p58 = scmp.ne.s32.totalorder %s47, %s50
      %p59 = scmp.eq.s32.totalorder %s19, 3
      %p60 = por %p58, %p59
      %p61 = scmp.ne.s32.totalorder %s50, %s51
      %p62 = scmp.eq.s32.totalorder %s19, 0
      %p63 = por %p61, %p62
      %p64 = scmp.ne.s32.totalorder %s50, %s51
      %p65 = scmp.eq.s32.totalorder %s20, 3
      %p66 = por %p64, %p65
      %p68 = scmp.ne.s32.totalorder %s51, %s67
      %p69 = scmp.eq.s32.totalorder %s20, 0
      %p70 = por %p68, %p69
      %s72 = sadd.s32 %s71, 1
      %p75 = scmp.eq.s32.totalorder %s14, 3
      %p76 = scmp.ne.s32.totalorder %s71, %s73
      %p77 = scmp.eq.s32.totalorder %s14, 0
      %p78 = por %p76, %p77
      %p79 = scmp.ne.s32.totalorder %s71, %s73
      %p80 = scmp.eq.s32.totalorder %s19, 3
      %p81 = por %p79, %p80
      %p82 = scmp.ne.s32.totalorder %s73, %s74
      %p83 = scmp.eq.s32.totalorder %s19, 0
      %p84 = por %p82, %p83
      %p85 = scmp.ne.s32.totalorder %s73, %s74
      %p86 = scmp.eq.s32.totalorder %s20, 3
      %p87 = por %p85, %p86
      %p89 = scmp.ne.s32.totalorder %s74, %s88
      %p90 = scmp.eq.s32.totalorder %s20, 0
      %p91 = por %p89, %p90
      %s92 = ssub.s32 %s21, %s40
      %s93 = ssub.s32 %s22, %s36
      %s94 = sor.u32 %s92, %s93
      %s95 = ssub.s32 %s23, %s32
      %s96 = sor.u32 %s94, %s95
      %p97 = scmp.eq.s32.totalorder %s96, 0
      %s99 = sadd.s32 %s98, 1
      %s100 = scalar_select %p97, %s98, %s99
      %p103 = pneg %p97
      %p104 = scmp.eq.s32.totalorder %s14, 3
      %p105 = por %p103, %p104
      %p106 = scmp.ne.s32.totalorder %s98, %s101
      %p107 = scmp.eq.s32.totalorder %s14, 0
      %p108 = por %p106, %p107
      %p109 = scmp.ne.s32.totalorder %s98, %s101
      %p110 = scmp.eq.s32.totalorder %s19, 3
      %p111 = por %p109, %p110
      %p112 = scmp.ne.s32.totalorder %s101, %s102
      %p113 = scmp.eq.s32.totalorder %s19, 0
      %p114 = por %p112, %p113
      %p115 = scmp.ne.s32.totalorder %s101, %s102
      %p116 = scmp.eq.s32.totalorder %s20, 3
      %p117 = por %p115, %p116
      %p119 = scmp.ne.s32.totalorder %s102, %s118
      %p120 = scmp.eq.s32.totalorder %s20, 0
      %p121 = por %p119, %p120
      %p122 = scmp.le.s32.totalorder 1, %s14
      %p123 = scmp.lt.s32.totalorder %s14, 5
      %p124 = pnand %p122, %p123
      %p125 = pneg %p124
      // Predicated region
      $region9: #{tpu_custom_call.1} parent=5 // pred_check
        _
      $region10: #{tpu_custom_call.1} parent=5 // pred_check_branch
        %127 = sbr.rel (%p124) target = $region12
      $region11: #{tpu_custom_call.1} parent=5 // pred_region
        %s128 = ssub.s32 %s14, 1
        // Predicated region
        $region13: #{tpu_custom_call.1} parent=11 // pred_check
          %p129 = pneg %p84
        $region14: #{tpu_custom_call.1} parent=11 // pred_check_branch
          %131 = sbr.rel (%p129) target = $region16
        $region15: #{tpu_custom_call.1} parent=11 // pred_region
          _
        $region16: #{tpu_custom_call.1} parent=11 // pred_fallthru
          _
      $region12: #{tpu_custom_call.1} parent=5 // pred_fallthru
        _
      %p132 = scmp.lt.s32.totalorder %s14, 4
      // Predicated region
      $region17: #{tpu_custom_call.1} parent=5 // pred_check
        %p133 = pneg %p132
      $region18: #{tpu_custom_call.1} parent=5 // pred_check_branch
        %135 = sbr.rel (%p133) target = $region20
      $region19: #{tpu_custom_call.1} parent=5 // pred_region
        // Predicated region
        $region21: #{tpu_custom_call.1} parent=19 // pred_check
          %p136 = pneg %p57
        $region22: #{tpu_custom_call.1} parent=19 // pred_check_branch
          %138 = sbr.rel (%p136) target = $region24
        $region23: #{tpu_custom_call.1} parent=19 // pred_region
          %s139 = sand.u32 %s47, 1
          %s140 = scalar_lea.sflag [#allocation3], %s139
          %s141 = sand.u32 %s47, 1
          %s142 = smul.addr %s141, 16
          %s143 = scalar_lea.vmem [#allocation2], %s142
          %s144 = smul.u32 2, %s22
          %146 = vsyncadd %s140, 0
          %s147 = sadd.s32 %s23, %s144
          %s148 = smul.addr %s21, 2
          %s149 = sadd.s32 %s147, %s148
          %s150 = smul.addr %s149, 8
          %s151 = scalar_lea.hbm %s0, %s150
          %s152 = sshll.u32 %s151, 4
          %s153 = int_to_ptr.hbm [resolvable:$true] %s152
          %s154 = sshll.u32 %s143, 4
          %s155 = int_to_ptr.vmem [resolvable:$true] %s154
          %160 = dma.hbm_to_vmem [thread:$0]  %s153, 256, %s155, %s140, 128, 128, 8
        $region24: #{tpu_custom_call.1} parent=19 // pred_fallthru
          _
      $region20: #{tpu_custom_call.1} parent=5 // pred_fallthru
        _
      %p161 = scmp.le.s32.totalorder 1, %s14
      %p162 = scmp.lt.s32.totalorder %s14, 5
      %p163 = pnand %p161, %p162
      %p164 = pneg %p163
      // Predicated region
      $region25: #{tpu_custom_call.1} parent=5 // pred_check
        _
      $region26: #{tpu_custom_call.1} parent=5 // pred_check_branch
        %166 = sbr.rel (%p163) target = $region28
      $region27: #{tpu_custom_call.1} parent=5 // pred_region
        %s167 = ssub.s32 %s14, 1
        %s168 = sand.u32 %s50, 1
        %s169 = scalar_lea.sflag [#allocation3], %s168
        %s170 = sand.u32 %s50, 1
        %s171 = smul.addr %s170, 16
        %s172 = scalar_lea.vmem [#allocation2], %s171
        // Predicated region
        $region29: #{tpu_custom_call.1} parent=27 // pred_check
          %p173 = pneg %p63
        $region30: #{tpu_custom_call.1} parent=27 // pred_check_branch
          %175 = sbr.rel (%p173) target = $region32
        $region31: #{tpu_custom_call.1} parent=27 // pred_region
          %177 = dma.done %s169, 256
        $region32: #{tpu_custom_call.1} parent=27 // pred_fallthru
          _
        %s178 = sand.u32 %s50, 1
        %s179 = scalar_lea.sflag [#allocation3], %s178
        %s180 = sand.u32 %s50, 1
        %s181 = smul.addr %s180, 16
        %s182 = scalar_lea.vmem [#allocation2], %s181
        %p183 = pneg %p63
        %p184 = pneg %p60
        %p185 = pneg %p84
        %p186 = pneg %p81
        %p187 = pneg %p114
        %p188 = pneg %p111
        %s189 = sand.u32 %s101, 1
        %s190 = scalar_lea.sflag [#allocation4], %s189
        %s191 = sand.u32 %s101, 1
        %s192 = smul.addr %s191, 4
        %s193 = scalar_lea.vmem [#allocation5], %s192
        %s194 = smul.u32 2, %s25
        %v195 = vld [vmem:[%s172] ss:$4 sm:$0xf]
        %v196 = vmul.f32 %v195, 0.22483605
        %s197 = scalar_lea.vmem %s172, 1 [#allocation2]
        %v198 = vld [vmem:[%s197] ss:$4 sm:$0xf]
        %v199 = vmul.f32 %v198, 0.25477448
        %v200 = vadd.f32 %v196, %v199
        %s201 = scalar_lea.vmem %s172, 2 [#allocation2]
        %v202 = vld [vmem:[%s201] ss:$4 sm:$0xf]
        %v203 = vmul.f32 %v202, 0.26561502
        %v204 = vadd.f32 %v200, %v203
        %s205 = scalar_lea.vmem %s172, 3 [#allocation2]
        %v206 = vld [vmem:[%s205] ss:$4 sm:$0xf]
        %v207 = vmul.f32 %v206, 0.25477448
        %v208 = vadd.f32 %v204, %v207
        %v209 = vld [vmem:[%s1] sm:$0xff]
        %v210 = vld [vmem:[%s1 + $0x8] sm:$0xff]
        %vm211 = vcmask 130048
        %v213 = vsel %vm211, %v208, 0
        %215 = vmatpush.msra.mxu0 0.0
        %216 = vmatpush.msra.mxu0 0.0
        %217 = vmatpush.msra.mxu0 0.0
        %218 = vmatpush.msra.mxu0 0.0
        %219 = vmatpush.msra.mxu0 0.0
        %220 = vmatpush.msra.mxu0 0.0
        %221 = vmatpush.msra.mxu0 0.0
        %222 = vmatpush.msra.mxu0 0.0
        %223 = vmatpush.msra.mxu0 0.0
        %224 = vmatpush.msra.mxu0 0.0
        %225 = vmatpush.msra.mxu0 0.0
        %226 = vmatpush.msra.mxu0 0.0
        %227 = vmatpush.msra.mxu0 0.0
        %228 = vmatpush.msra.mxu0 0.0
        %229 = vmatpush.msra.mxu0 %v210
        %230 = vmatpush.msra.mxu0 %v209
        %231 = vmatmul.f32.gmra.mxu0 %v213
        %v232 = vpop.f32.mrf.mxu0
        %v233 = vadd.f32 0.0, %v232
        %234 = vdwg.mxu0
        %vm235 = vcmask 27648
        %236 = vst.msk [vmem:[%s193] sm:$0xf] %vm235, %v233
        %s237 = sand.u32 %s101, 1
        %s238 = scalar_lea.sflag [#allocation4], %s237
        %s239 = sand.u32 %s101, 1
        %s240 = smul.addr %s239, 4
        %s241 = scalar_lea.vmem [#allocation5], %s240
        // Predicated region
        $region33: #{tpu_custom_call.1} parent=27 // pred_check
          %p242 = pneg %p111
        $region34: #{tpu_custom_call.1} parent=27 // pred_check_branch
          %244 = sbr.rel (%p242) target = $region36
        $region35: #{tpu_custom_call.1} parent=27 // pred_region
          %246 = vsyncadd %s238, 0
          %s247 = sadd.s32 %s26, %s25
          %s248 = sadd.s32 %s247, %s24
          %s249 = smul.addr %s248, 4
          %s250 = scalar_lea.hbm %s2, %s249
          %s252 = sshll.u32 %s241, 4
          %s253 = int_to_ptr.vmem [resolvable:$true] %s252
          %s254 = sshll.u32 %s250, 4
          %s255 = int_to_ptr.hbm [resolvable:$true] %s254
          %257 = dma.vmem_to_hbm [thread:$0]  %s253, 64, %s255, %s238
        $region36: #{tpu_custom_call.1} parent=27 // pred_fallthru
          _
      $region28: #{tpu_custom_call.1} parent=5 // pred_fallthru
        _
      %p258 = scmp.le.s32.totalorder 2, %s14
      // Predicated region
      $region37: #{tpu_custom_call.1} parent=5 // pred_check
        %p259 = pneg %p258
      $region38: #{tpu_custom_call.1} parent=5 // pred_check_branch
        %261 = sbr.rel (%p259) target = $region40
      $region39: #{tpu_custom_call.1} parent=5 // pred_region
        %s262 = ssub.s32 %s14, 2
        // Predicated region
        $region41: #{tpu_custom_call.1} parent=39 // pred_check
          %p263 = pneg %p117
        $region42: #{tpu_custom_call.1} parent=39 // pred_check_branch
          %265 = sbr.rel (%p263) target = $region44
        $region43: #{tpu_custom_call.1} parent=39 // pred_region
          %s266 = sand.u32 %s102, 1
          %s267 = scalar_lea.sflag [#allocation4], %s266
          %s268 = sand.u32 %s102, 1
          %s269 = smul.addr %s268, 4
          %s270 = scalar_lea.vmem [#allocation5], %s269
          %272 = dma.done %s267, 64
        $region44: #{tpu_custom_call.1} parent=39 // pred_fallthru
          _
      $region40: #{tpu_custom_call.1} parent=5 // pred_fallthru
        _
    $region6: #{tpu_custom_call.1} parent=1 // loop_footer
      %s18 = sadd.s32 1, %s14
    $region7: #{tpu_custom_call.1} parent=1 // loop_footer_branch
      %13 = sbr.rel target = $region3
    $region8: #{tpu_custom_call.1} parent=1 // loop_exit
      _
    %273 = vsyncpa [#allocation3], 1
    %s274 = scalar_lea.sflag [#allocation3], 1
    %275 = vsyncpa %s274, 1
    %276 = vsyncpa [#allocation4], 1
    %s277 = scalar_lea.sflag [#allocation4], 1
    %278 = vsyncpa %s277, 1

</llo_original>
